<compile_context>
chip_gen: v7x
topology: tpu7x:2x2x1
jax: 0.10.0
libtpu: 0.0.40
codegen_flags: <defaults>
</compile_context>

<pallas_src>
import functools
import math

import jax
import jax.numpy as jnp
from jax.experimental import pallas as pl
from jax.experimental.pallas import tpu as pltpu

_LANE = 128
_SUBLANE = 8


def _round_up(v, m):
    return ((v + m - 1) // m) * m


def _mlp_chain_kernel(*refs, n_layers, dot_dtype):
    """Fused chain of Linear(+ReLU) layers on one (tile_m, d_in_p) batch tile.

    refs = (x_ref, w0, b0, w1, b1, ..., w_{L-1}, b_{L-1}, out_ref).
    Weights arrive already padded (and possibly bf16); biases are f32.
    Matmuls accumulate in f32 on the MXU; bias-add / ReLU run in f32 on the VPU.
    """
    x_ref = refs[0]
    out_ref = refs[-1]
    param_refs = refs[1:-1]

    # TODO(synk): if hidden widths ever grow large (>=512) with a big tile_m,
    # stage `h` in a VMEM scratch and loop over N-subtiles to avoid vreg spills.
    h = x_ref[...].astype(jnp.float32)
    for l in range(n_layers):
        w = param_refs[2 * l][...]                       # (K_p, N_p), dot_dtype
        b = param_refs[2 * l + 1][...].astype(jnp.float32)  # (1, N_p)
        acc = jnp.dot(h.astype(dot_dtype), w.astype(dot_dtype),
                      preferred_element_type=jnp.float32)
        h = acc + b
        if l < n_layers - 1:                             # no ReLU after last Linear
            h = jnp.maximum(h, 0.0)
    out_ref[...] = h.astype(out_ref.dtype)


def linear_relu_block_forward(x, params, *, tile_m=256, dot_dtype=None):
    """Fused forward pass of the (Linear -> ReLU)*(L-1) -> Linear chain.

    x:         (M, in_features) array
    params:    list of (W, b) with W: (in, out), b: (out,)
    tile_m:    target batch tile (clamped to the batch, multiple of 8)
    dot_dtype: dtype fed to the MXU (None -> x.dtype; jnp.bfloat16 for the
               fast v6e/v7x path; accumulation is always f32).
    """
    M, d_in = x.shape
    n_layers = len(params)
    out_dim = params[-1][0].shape[1]
    out_dtype = x.dtype
    if dot_dtype is None:
        dot_dtype = x.dtype

    # ---- host-side one-time padding to 128-lane-aligned shapes -------------
    d_in_p = _round_up(d_in, _LANE)
    padded = []
    k_prev = d_in_p
    for (w, b) in params:
        k, n = w.shape
        k_p, n_p = _round_up(k, _LANE), _round_up(n, _LANE)
        assert k_p == k_prev, "layer chain is shape-inconsistent"
        w_p = jnp.pad(w, ((0, k_p - k), (0, n_p - n))).astype(dot_dtype)
        b_p = jnp.pad(b.astype(jnp.float32), (0, n_p - n)).reshape(1, n_p)
        padded.append((w_p, b_p))
        k_prev = n_p
    out_dim_p = k_prev

    # ---- batch tiling: big tiles, but never bigger than the batch ----------
    tm = min(tile_m, _round_up(M, _SUBLANE))
    tm = _round_up(tm, _SUBLANE)
    M_p = _round_up(M, tm)
    x_p = jnp.pad(x, ((0, M_p - M), (0, d_in_p - d_in)))
    grid = (M_p // tm,)

    # ---- specs --------------------------------------------------------------
    in_specs = [pl.BlockSpec((tm, d_in_p), lambda i: (i, 0))]
    flat_params = []
    for (w_p, b_p) in padded:
        flat_params.append(w_p)
        flat_params.append(b_p)
        # Per-layer params are small: hand every grid step the full array
        # (constant index_map -> resident in VMEM across all batch tiles).
        in_specs.append(pl.BlockSpec(w_p.shape, lambda i: (0, 0)))
        in_specs.append(pl.BlockSpec(b_p.shape, lambda i: (0, 0)))
    out_spec = pl.BlockSpec((tm, out_dim_p), lambda i: (i, 0))

    # ---- VMEM budget + cost estimate ---------------------------------------
    def _nbytes(a):
        return a.size * jnp.dtype(a.dtype).itemsize

    param_bytes = sum(_nbytes(w) + _nbytes(b) for (w, b) in padded)
    itemsz = jnp.dtype(out_dtype).itemsize
    io_tile_bytes = tm * d_in_p * jnp.dtype(x.dtype).itemsize + tm * out_dim_p * itemsz
    # double-buffered I/O tiles + (double-buffered) params + slack, capped with
    # headroom against v7x's 64 MiB physical VMEM.
    vmem_budget = 2 * (io_tile_bytes + param_bytes) + (8 << 20)
    vmem_budget = int(min(max(vmem_budget, 16 << 20), 64 << 20))

    flops = 2 * M_p * sum(w.shape[0] * w.shape[1] for (w, _) in padded)
    bytes_accessed = (M_p * d_in_p * jnp.dtype(x.dtype).itemsize
                      + M_p * out_dim_p * itemsz
                      + grid[0] * param_bytes)
    cost = pl.CostEstimate(flops=flops, transcendentals=0,
                           bytes_accessed=bytes_accessed)

    kernel = functools.partial(_mlp_chain_kernel,
                               n_layers=n_layers, dot_dtype=dot_dtype)

    out_p = pl.pallas_call(
        kernel,
        out_shape=jax.ShapeDtypeStruct((M_p, out_dim_p), out_dtype),
        grid_spec=pltpu.PrefetchScalarGridSpec(
            num_scalar_prefetch=0,
            grid=grid,
            in_specs=in_specs,
            out_specs=out_spec,
        ),
        compiler_params=pltpu.CompilerParams(
            dimension_semantics=("parallel",),
            vmem_limit_bytes=vmem_budget),
        cost_estimate=cost,
    )(x_p, *flat_params)

    return out_p[:M, :out_dim]


def linear_relu_block_dims(input_dim, output_dim, n_layers):
    """Exact reproduction of LinearReluBlock.__init__'s (in, out) per layer."""
    if input_dim > output_dim:
        dim_step = input_dim - output_dim // n_layers   # NB: // binds tighter, as in the reference
        in_features = lambda i: input_dim - i * dim_step
        out_features = lambda i: input_dim - (i + 1) * dim_step
    else:
        dim_step = output_dim - input_dim // n_layers
        in_features = lambda i: input_dim + i * dim_step
        out_features = lambda i: input_dim + (i + 1) * dim_step
    dims = []
    for i in range(n_layers - 1):
        dims.append((in_features(i), out_features(i)))
    dims.append((out_features(n_layers - 1), output_dim))
    return dims


def init_params(key, dims):
    """Deterministic nn.Linear-style init: U(-1/sqrt(fan_in), 1/sqrt(fan_in))."""
    params = []
    for (fan_in, fan_out) in dims:
        key, kw, kb = jax.random.split(key, 3)
        bound = 1.0 / math.sqrt(fan_in)
        w = jax.random.uniform(kw, (fan_in, fan_out), jnp.float32, -bound, bound)
        b = jax.random.uniform(kb, (fan_out,), jnp.float32, -bound, bound)
        params.append((w, b))
    return params


def reference_forward(x, params):
    """Plain-JAX reference of the same chain (for correctness checking)."""
    h = x
    for l, (w, b) in enumerate(params):
        h = h @ w + b
        if l < len(params) - 1:
            h = jnp.maximum(h, 0.0)
    return h


if __name__ == "__main__":
    key = jax.random.PRNGKey(0)

    # TODO(synk): for n_layers >= 2 the reference __init__ miscomputes
    # dim_step (`input_dim - output_dim // n_layers`, // binds tighter), so the
    # generated chain is shape-inconsistent and the PyTorch forward itself
    # raises; n_layers=1 is the only runnable configuration and is reproduced
    # exactly. The multi-layer Linear+ReLU kernel path is exercised with a
    # chain-consistent stack.

    # ---- Module-exact config: input_dim=32, output_dim=32, n_layers=1 ------
    input_dim, output_dim, n_layers = 32, 32, 1
    dims = linear_relu_block_dims(input_dim, output_dim, n_layers)
    kp, kx = jax.random.split(key)
    params = init_params(kp, dims)

    batch = 8
    x = jax.random.normal(kx, (batch, dims[0][0]), jnp.float32)

    y = jax.block_until_ready(linear_relu_block_forward(x, params, tile_m=256))
    y_ref = reference_forward(x, params)
    assert y.shape == (batch, output_dim)
    assert jnp.allclose(y, y_ref, atol=1e-5, rtol=1e-5), "module-exact mismatch"

    # ---- Multi-layer (Linear->ReLU)*2 -> Linear, f32 path (strict check) ----
    dims_ml = [(32, 64), (64, 48), (48, 16)]
    kp2, kx2 = jax.random.split(kp)
    params_ml = init_params(kp2, dims_ml)
    x2 = jax.random.normal(kx2, (272, 32), jnp.float32)   # 3 grid steps @ tm=128
    y2_ref = reference_forward(x2, params_ml)

    y2 = jax.block_until_ready(
        linear_relu_block_forward(x2, params_ml, tile_m=128))
    assert jnp.allclose(y2, y2_ref, atol=1e-4, rtol=1e-4), "multi-layer f32 mismatch"

    # ---- Same chain on the bf16 MXU fast path (f32 accumulate) -------------
    y3 = jax.block_until_ready(
        linear_relu_block_forward(x2, params_ml, tile_m=128,
                                  dot_dtype=jnp.bfloat16))
    assert jnp.allclose(y3, y2_ref, atol=1e-1, rtol=5e-2), "multi-layer bf16 mismatch"

    print("KERNEL_OK")
</pallas_src>

<mosaic_0001>
module attributes {stable_mosaic.version = 11 : i64} {
  func.func @_mlp_chain_kernel(%arg0: i32, %arg1: memref<8x128xf32, #tpu.memory_space<vmem>>, %arg2: memref<128x128xf32, #tpu.memory_space<vmem>>, %arg3: memref<1x128xf32, #tpu.memory_space<vmem>>, %arg4: memref<8x128xf32, #tpu.memory_space<vmem>>) attributes {dimension_semantics = [#tpu.dimension_semantics<parallel>], iteration_bounds = array<i64: 1>, scalar_prefetch = 0 : i64, scratch_operands = 0 : i64, tpu.core_type = #tpu.core_type<tc>, window_params = [{transform_indices = @transform_0, window_bounds = array<i64: 8, 128>}, {pipeline_mode = #tpu.pipeline_mode<synchronous>, transform_indices = @transform_1, window_bounds = array<i64: 128, 128>}, {pipeline_mode = #tpu.pipeline_mode<synchronous>, transform_indices = @transform_2, window_bounds = array<i64: 1, 128>}, {transform_indices = @transform_3, window_bounds = array<i64: 8, 128>}]} {
    %c0 = arith.constant 0 : index
    %c0_0 = arith.constant 0 : index
    %0 = vector.load %arg1[%c0, %c0_0] : memref<8x128xf32, #tpu.memory_space<vmem>>, vector<8x128xf32>
    %c0_1 = arith.constant 0 : index
    %c0_2 = arith.constant 0 : index
    %1 = vector.load %arg2[%c0_1, %c0_2] : memref<128x128xf32, #tpu.memory_space<vmem>>, vector<128x128xf32>
    %c0_3 = arith.constant 0 : index
    %c0_4 = arith.constant 0 : index
    %2 = vector.load %arg3[%c0_3, %c0_4] : memref<1x128xf32, #tpu.memory_space<vmem>>, vector<1x128xf32>
    %cst = arith.constant dense<0.000000e+00> : vector<8x128xf32>
    %3 = tpu.matmul %0, %1, %cst {dimension_numbers = #tpu.dot_dimension_numbers<[1], [0], [0], [1], [0, 0, 1, 1], [], []>} : vector<8x128xf32>, vector<128x128xf32>, vector<8x128xf32> -> vector<8x128xf32>
    %4 = vector.broadcast %2 : vector<1x128xf32> to vector<8x128xf32>
    %5 = arith.addf %3, %4 : vector<8x128xf32>
    %c0_5 = arith.constant 0 : index
    %c0_6 = arith.constant 0 : index
    %6 = vector.load %arg4[%c0_5, %c0_6] : memref<8x128xf32, #tpu.memory_space<vmem>>, vector<8x128xf32>
    tpu.vector_store %arg4[%c0_5, %c0_6], %5 {strides = array<i32>} : memref<8x128xf32, #tpu.memory_space<vmem>>, vector<8x128xf32>,
    return
  }
  func.func @transform_0(%arg0: i32) -> (i32, i32) {
    %c0_i32 = arith.constant 0 : i32
    %c0_i32_0 = arith.constant 0 : i32
    return %arg0, %c0_i32 : i32, i32
  }
  func.func @transform_1(%arg0: i32) -> (i32, i32) {
    %c0_i32 = arith.constant 0 : i32
    %c0_i32_0 = arith.constant 0 : i32
    %c0_i32_1 = arith.constant 0 : i32
    return %c0_i32, %c0_i32_0 : i32, i32
  }
  func.func @transform_2(%arg0: i32) -> (i32, i32) {
    %c0_i32 = arith.constant 0 : i32
    %c0_i32_0 = arith.constant 0 : i32
    %c0_i32_1 = arith.constant 0 : i32
    return %c0_i32, %c0_i32_0 : i32, i32
  }
  func.func @transform_3(%arg0: i32) -> (i32, i32) {
    %c0_i32 = arith.constant 0 : i32
    %c0_i32_0 = arith.constant 0 : i32
    return %arg0, %c0_i32 : i32, i32
  }
}

</mosaic_0001>

<llo_original>
// kernel: tpu_custom_call.1
$region0: #{tpu_custom_call.1}
  #allocation0 [shape = 'u32[]', space=smem, size = 0x4, offset = 0x4, fixed_abs, tag = 'smem constant byte address 0x4 - core index']
  #allocation1 [shape = 'u32[144,128]{1,0:T(1,128)}', space=vmem, size = 0x12000, scoped, tag = 'internal scratch']
  %s0 = inlined_call_operand.hbm [shape: f32[8,128], index: 0, kind: input, shape index: {}]
  %s1 = inlined_call_operand.hbm [shape: f32[128,128], index: 1, kind: input, shape index: {}]
  %s2 = inlined_call_operand.vmem [shape: f32[1,128], index: 2, kind: input, shape index: {}]
  %s3 = inlined_call_operand.hbm [shape: f32[8,128], index: 3, kind: output, shape index: {}]
  %s4 = sld [smem:[#allocation0]]
  $region30: #{tpu_custom_call.1} parent=0
    _
  %s6 = ssub.s32 1, %s4
  %s7 = scalar_select 0, %s6, %s4
  $region1: #{tpu_custom_call.1} parent=0
    #allocation2 [shape = 'u8[4096]{0}', space=vmem, size = 0x1000, scoped, tag = 'input window, operand 0, single buffered']
    #allocation3 [shape = 's32[1]{0}', space=sflag, size = 0x4, scoped, tag = 'scoped memory for tpu_custom_call.1']
    #allocation4 [shape = 's32[1]{0}', space=sflag, size = 0x4, scoped, tag = 'scoped memory for tpu_custom_call.1']
    #allocation5 [shape = 'u8[65536]{0}', space=vmem, size = 0x10000, scoped, tag = 'input window, operand 1, single buffered']
    #allocation6 [shape = 's32[1]{0}', space=sflag, size = 0x4, scoped, tag = 'scoped memory for tpu_custom_call.1']
    #allocation7 [shape = 'u8[4096]{0}', space=vmem, size = 0x1000, scoped, tag = 'output window, operand 0, single buffered']
    %8 = vsyncpa [#allocation3], 0
    %9 = vsyncpa [#allocation6], 0
    %10 = vsyncpa [#allocation4], 0
    // Predicated region
    $region2: #{tpu_custom_call.1} parent=1 // pred_check
      _
    $region3: #{tpu_custom_call.1} parent=1 // pred_check_branch
      %12 = sbr.rel (0) target = $region5
    $region4: #{tpu_custom_call.1} parent=1 // pred_region
      %s14 = ssub.s32 128, 128
      %15 = vsyncadd [#allocation3], %s14
      %s17 = sshll.u32 [#allocation2], 4
      %s18 = int_to_ptr.vmem [resolvable:$true] %s17
      %20 = dma.hbm_to_vmem [thread:$0]  %s0, 128, %s18, [#allocation3]
    $region5: #{tpu_custom_call.1} parent=1 // pred_fallthru
      _
    // Predicated region
    $region6: #{tpu_custom_call.1} parent=1 // pred_check
      _
    $region7: #{tpu_custom_call.1} parent=1 // pred_check_branch
      %22 = sbr.rel (0) target = $region9
    $region8: #{tpu_custom_call.1} parent=1 // pred_region
      %s24 = ssub.s32 2048, 2048
      %25 = vsyncadd [#allocation6], %s24
      %s26 = sshll.u32 [#allocation5], 4
      %s27 = int_to_ptr.vmem [resolvable:$true] %s26
      %32 = dma.hbm_to_vmem [thread:$0]  %s1, 2048, %s27, [#allocation6], 128, 128, 8
    $region9: #{tpu_custom_call.1} parent=1 // pred_fallthru
      _
    // Predicated region
    $region10: #{tpu_custom_call.1} parent=1 // pred_check
      _
    $region11: #{tpu_custom_call.1} parent=1 // pred_check_branch
      %34 = sbr.rel (0) target = $region13
    $region12: #{tpu_custom_call.1} parent=1 // pred_region
      _
    $region13: #{tpu_custom_call.1} parent=1 // pred_fallthru
      _
    // Predicated region
    $region14: #{tpu_custom_call.1} parent=1 // pred_check
      _
    $region15: #{tpu_custom_call.1} parent=1 // pred_check_branch
      %36 = sbr.rel (0) target = $region17
    $region16: #{tpu_custom_call.1} parent=1 // pred_region
      %37 = dma.done [#allocation3], 128
    $region17: #{tpu_custom_call.1} parent=1 // pred_fallthru
      _
    // Predicated region
    $region18: #{tpu_custom_call.1} parent=1 // pred_check
      _
    $region19: #{tpu_custom_call.1} parent=1 // pred_check_branch
      %39 = sbr.rel (0) target = $region21
    $region20: #{tpu_custom_call.1} parent=1 // pred_region
      %40 = dma.done [#allocation6], 2048
    $region21: #{tpu_custom_call.1} parent=1 // pred_fallthru
      _
    %v41 = vld [vmem:[#allocation2] sm:$0xff]
    %v42 = vld [vmem:[#allocation5] sm:$0xff]
    %v43 = vld [vmem:[#allocation5 + $0x8] sm:$0xff]
    %v44 = vld [vmem:[#allocation5 + $0x10] sm:$0xff]
    %v45 = vld [vmem:[#allocation5 + $0x18] sm:$0xff]
    %v46 = vld [vmem:[#allocation5 + $0x20] sm:$0xff]
    %v47 = vld [vmem:[#allocation5 + $0x28] sm:$0xff]
    %v48 = vld [vmem:[#allocation5 + $0x30] sm:$0xff]
    %v49 = vld [vmem:[#allocation5 + $0x38] sm:$0xff]
    %v50 = vld [vmem:[#allocation5 + $0x40] sm:$0xff]
    %v51 = vld [vmem:[#allocation5 + $0x48] sm:$0xff]
    %v52 = vld [vmem:[#allocation5 + $0x50] sm:$0xff]
    %v53 = vld [vmem:[#allocation5 + $0x58] sm:$0xff]
    %v54 = vld [vmem:[#allocation5 + $0x60] sm:$0xff]
    %v55 = vld [vmem:[#allocation5 + $0x68] sm:$0xff]
    %v56 = vld [vmem:[#allocation5 + $0x70] sm:$0xff]
    %v57 = vld [vmem:[#allocation5 + $0x78] sm:$0xff]
    %v58 = vld [vmem:[%s2] sm:$0x1]
    %v60 = vlaneseq
    %v61 = vshrl.u32 %v60, 7
    %v62 = vsub.s32 0, %v61
    %v63 = vrot.slane %v58, %v62
    %65 = vmatprep.subr.mxu0 0.0
    %66 = vmatpush1.msra.mxu0 %v42
    %67 = vmatprep.subr.mxu0 0.0
    %68 = vmatpush1.msra.mxu0 %v43
    %69 = vmatprep.subr.mxu0 0.0
    %70 = vmatpush1.msra.mxu0 %v44
    %71 = vmatprep.subr.mxu0 0.0
    %72 = vmatpush1.msra.mxu0 %v45
    %73 = vmatprep.subr.mxu0 0.0
    %74 = vmatpush1.msra.mxu0 %v46
    %75 = vmatprep.subr.mxu0 0.0
    %76 = vmatpush1.msra.mxu0 %v47
    %77 = vmatprep.subr.mxu0 0.0
    %78 = vmatpush1.msra.mxu0 %v48
    %79 = vmatprep.subr.mxu0 0.0
    %80 = vmatpush1.msra.mxu0 %v49
    %81 = vmatprep.subr.mxu0 0.0
    %82 = vmatpush1.msra.mxu0 %v50
    %83 = vmatprep.subr.mxu0 0.0
    %84 = vmatpush1.msra.mxu0 %v51
    %85 = vmatprep.subr.mxu0 0.0
    %86 = vmatpush1.msra.mxu0 %v52
    %87 = vmatprep.subr.mxu0 0.0
    %88 = vmatpush1.msra.mxu0 %v53
    %89 = vmatprep.subr.mxu0 0.0
    %90 = vmatpush1.msra.mxu0 %v54
    %91 = vmatprep.subr.mxu0 0.0
    %92 = vmatpush1.msra.mxu0 %v55
    %93 = vmatprep.subr.mxu0 0.0
    %94 = vmatpush1.msra.mxu0 %v56
    %95 = vmatprep.subr.mxu0 0.0
    %96 = vmatpush1.msra.mxu0 %v57
    %97 = vmatprep.subr.mxu0 0.0
    %98 = vmatpush1.msra.mxu0 0.0
    %99 = vmatprep.subr.mxu0 0.0
    %100 = vmatpush1.msra.mxu0 0.0
    %101 = vmatprep.subr.mxu0 0.0
    %102 = vmatpush1.msra.mxu0 0.0
    %103 = vmatprep.subr.mxu0 0.0
    %104 = vmatpush1.msra.mxu0 0.0
    %105 = vmatprep.subr.mxu0 0.0
    %106 = vmatpush1.msra.mxu0 0.0
    %107 = vmatprep.subr.mxu0 0.0
    %108 = vmatpush1.msra.mxu0 0.0
    %109 = vmatprep.subr.mxu0 0.0
    %110 = vmatpush1.msra.mxu0 0.0
    %111 = vmatprep.subr.mxu0 0.0
    %112 = vmatpush1.msra.mxu0 0.0
    %113 = vmatprep.subr.mxu0 0.0
    %114 = vmatpush1.msra.mxu0 0.0
    %115 = vmatprep.subr.mxu0 0.0
    %116 = vmatpush1.msra.mxu0 0.0
    %117 = vmatprep.subr.mxu0 0.0
    %118 = vmatpush1.msra.mxu0 0.0
    %119 = vmatprep.subr.mxu0 0.0
    %120 = vmatpush1.msra.mxu0 0.0
    %121 = vmatprep.subr.mxu0 0.0
    %122 = vmatpush1.msra.mxu0 0.0
    %123 = vmatprep.subr.mxu0 0.0
    %124 = vmatpush1.msra.mxu0 0.0
    %125 = vmatprep.subr.mxu0 0.0
    %126 = vmatpush1.msra.mxu0 0.0
    %127 = vmatprep.subr.mxu0 0.0
    %128 = vmatpush1.msra.mxu0 0.0
    %129 = vmatprep.mubr.f32.mxu0 0.0
    %130 = vmatmul.mubr.f32.gmra.mrb[0].mxu0 %v41
    %v131 = vpop.f32.mrb[0].mxu0
    %v132 = vadd.f32 %v63, %v131
    %v133 = vpop.f32.mrb[0].mxu0
    %134 = vdwg.mxu0
    %135 = vst [vmem:[#allocation7] sm:$0xff] %v132
    // Predicated region
    $region22: #{tpu_custom_call.1} parent=1 // pred_check
      _
    $region23: #{tpu_custom_call.1} parent=1 // pred_check_branch
      %137 = sbr.rel (0) target = $region25
    $region24: #{tpu_custom_call.1} parent=1 // pred_region
      %s139 = ssub.s32 128, 128
      %140 = vsyncadd [#allocation4], %s139
      %s142 = sshll.u32 [#allocation7], 4
      %s143 = int_to_ptr.vmem [resolvable:$true] %s142
      %145 = dma.vmem_to_hbm [thread:$0]  %s143, 128, %s3, [#allocation4]
    $region25: #{tpu_custom_call.1} parent=1 // pred_fallthru
      _
    // Predicated region
    $region26: #{tpu_custom_call.1} parent=1 // pred_check
      _
    $region27: #{tpu_custom_call.1} parent=1 // pred_check_branch
      %147 = sbr.rel (0) target = $region29
    $region28: #{tpu_custom_call.1} parent=1 // pred_region
      %148 = dma.done [#allocation4], 128
    $region29: #{tpu_custom_call.1} parent=1 // pred_fallthru
      _
    %149 = vsyncpa [#allocation3], 1
    %150 = vsyncpa [#allocation6], 1
    %151 = vsyncpa [#allocation4], 1

</llo_original>
